<compile_context>
chip_gen: v5e
topology: v5e:2x2
jax: 0.10.0
libtpu: 0.0.40
codegen_flags: <defaults>
</compile_context>

<pallas_src>
import jax
import jax.numpy as jnp
from jax.experimental import pallas as pl
from jax.experimental.pallas import tpu as pltpu


def fc_kernel(x_ref, wh_ref, bh_ref, wn_ref, bn_ref, out_ref):
    # hid = relu(x @ wHidden + wHiddenBias)                          (TM, H)
    hid = jnp.dot(x_ref[...], wh_ref[...], preferred_element_type=jnp.float32)
    hid = jnp.maximum(hid + bh_ref[...], 0.0)
    # Second layer (N=1): VPU multiply + XLU row-reduce instead of a 1-wide
    # MXU matmul.  dropprob is already folded into wn_ref; bias is an SMEM
    # scalar.  Result is written as a lane-dense (1, TM) tile.
    row = jnp.sum(hid * wn_ref[...], axis=-1) + bn_ref[0, 0]         # (TM,)
    out_ref[...] = row[None, :]                                      # (1, TM)


def _round_up(n, m):
    return ((n + m - 1) // m) * m


def fc_forward(x, w_hidden, w_hidden_bias, w_neu, w_neu_bias, dropprob, *, tm=4096):
    """x: [B, F] float32; returns [B, 1] float32 (eval path of FC.forward_pass)."""
    B, F = x.shape
    H = w_hidden.shape[1]

    # Fold dropprob into the output-layer weights; keep biases in clean layouts.
    wn_row = (float(dropprob) * w_neu).reshape(1, H).astype(jnp.float32)  # (1, H)
    bh = w_hidden_bias.reshape(1, H).astype(jnp.float32)                  # (1, H)
    bn = w_neu_bias.reshape(1, 1).astype(jnp.float32)                     # (1, 1) -> SMEM

    # Batch tiling: large lane-aligned tiles; small batches collapse to one tile.
    tm = min(tm, _round_up(max(B, 1), 128))
    b_pad = _round_up(B, tm)
    if b_pad != B:
        x = jnp.pad(x, ((0, b_pad - B), (0, 0)))
    num_tiles = b_pad // tm

    out_tiles = pl.pallas_call(
        fc_kernel,
        out_shape=jax.ShapeDtypeStruct((num_tiles, tm), jnp.float32),
        grid=(num_tiles,),
        in_specs=[
            pl.BlockSpec((tm, F), lambda i: (i, 0)),            # x: streamed per tile
            pl.BlockSpec((F, H), lambda i: (0, 0)),             # wHidden: resident
            pl.BlockSpec((1, H), lambda i: (0, 0)),             # wHiddenBias: resident
            pl.BlockSpec((1, H), lambda i: (0, 0)),             # dropprob*wNeu^T: resident
            pl.BlockSpec(memory_space=pltpu.MemorySpace.SMEM),  # wNeuBias scalar
        ],
        out_specs=pl.BlockSpec((1, tm), lambda i: (i, 0)),      # lane-dense output tile
        compiler_params=pltpu.CompilerParams(dimension_semantics=("parallel",)),
    )(x.astype(jnp.float32), w_hidden.astype(jnp.float32), bh, wn_row, bn)

    return out_tiles.reshape(b_pad)[:B].reshape(B, 1)


def init_params(key, nummotif, pool_type="maxavg", hidden=32):
    """Deterministic re-implementation of FC.__init__ parameter shapes/inits."""
    k1, k2, k3 = jax.random.split(key, 3)
    in_dim = 2 * nummotif if pool_type == "maxavg" else nummotif

    # torch.nn.init.normal_(wHidden, mean=0, std=0.3)
    w_hidden = 0.3 * jax.random.normal(k1, (in_dim, hidden), dtype=jnp.float32)
    # torch.nn.init.normal_(wHiddenBias, mean=0, std=0.3)
    w_hidden_bias = 0.3 * jax.random.normal(k2, (hidden,), dtype=jnp.float32)

    # wNeu: (33,1) xavier_uniform_, then split into (32,1) weight and (1,1) bias
    fan_in, fan_out = hidden + 1, 1
    bound = (6.0 / (fan_in + fan_out)) ** 0.5
    w_full = jax.random.uniform(k3, (hidden + 1, 1), minval=-bound, maxval=bound,
                                dtype=jnp.float32)
    w_neu, w_neu_bias = w_full[:hidden], w_full[hidden:]
    return w_hidden, w_hidden_bias, w_neu, w_neu_bias


if __name__ == "__main__":
    key = jax.random.PRNGKey(0)
    kx, kp, kx2 = jax.random.split(key, 3)

    nummotif = 16
    pool_type = "maxavg"            # -> input features = 2 * nummotif = 32
    dropprob = 0.75

    w_hidden, w_hidden_bias, w_neu, w_neu_bias = init_params(kp, nummotif, pool_type)

    def reference(x):
        hid = jnp.maximum(x @ w_hidden + w_hidden_bias, 0.0)
        return dropprob * (hid @ w_neu) + w_neu_bias

    # Small demo batch (single tile, padded 8 -> 128 rows).
    batch = 8
    x = jax.random.normal(kx, (batch, 2 * nummotif), dtype=jnp.float32)
    out = jax.block_until_ready(
        fc_forward(x, w_hidden, w_hidden_bias, w_neu, w_neu_bias, dropprob))
    assert out.shape == (batch, 1)
    assert jnp.allclose(out, reference(x), atol=1e-5, rtol=1e-5)

    # Multi-tile path: grid > 1, non-multiple batch exercises padding + slicing.
    batch2 = 600
    x2 = jax.random.normal(kx2, (batch2, 2 * nummotif), dtype=jnp.float32)
    out2 = jax.block_until_ready(
        fc_forward(x2, w_hidden, w_hidden_bias, w_neu, w_neu_bias, dropprob, tm=256))
    assert out2.shape == (batch2, 1)
    assert jnp.allclose(out2, reference(x2), atol=1e-5, rtol=1e-5)

    print("KERNEL_OK")
</pallas_src>

<mosaic_0001>
module attributes {stable_mosaic.version = 11 : i64} {
  func.func @fc_kernel(%arg0: i32, %arg1: memref<128x32xf32, #tpu.memory_space<vmem>>, %arg2: memref<32x32xf32, #tpu.memory_space<vmem>>, %arg3: memref<1x32xf32, #tpu.memory_space<vmem>>, %arg4: memref<1x32xf32, #tpu.memory_space<vmem>>, %arg5: memref<1x1xf32, #tpu.memory_space<smem>>, %arg6: memref<1x128xf32, #tpu.memory_space<vmem>>) attributes {dimension_semantics = [#tpu.dimension_semantics<parallel>], iteration_bounds = array<i64: 1>, scalar_prefetch = 0 : i64, scratch_operands = 0 : i64, tpu.core_type = #tpu.core_type<tc>, window_params = [{transform_indices = @transform_0, window_bounds = array<i64: 128, 32>}, {pipeline_mode = #tpu.pipeline_mode<synchronous>, transform_indices = @transform_1, window_bounds = array<i64: 32, 32>}, {pipeline_mode = #tpu.pipeline_mode<synchronous>, transform_indices = @transform_2, window_bounds = array<i64: 1, 32>}, {pipeline_mode = #tpu.pipeline_mode<synchronous>, transform_indices = @transform_3, window_bounds = array<i64: 1, 32>}, {transform_indices = @transform_4, window_bounds = array<i64: 1, 1>}, {transform_indices = @transform_5, window_bounds = array<i64: 1, 128>}]} {
    %c0 = arith.constant 0 : index
    %c0_0 = arith.constant 0 : index
    %0 = vector.load %arg1[%c0, %c0_0] : memref<128x32xf32, #tpu.memory_space<vmem>>, vector<128x32xf32>
    %c0_1 = arith.constant 0 : index
    %c0_2 = arith.constant 0 : index
    %1 = vector.load %arg2[%c0_1, %c0_2] : memref<32x32xf32, #tpu.memory_space<vmem>>, vector<32x32xf32>
    %cst = arith.constant dense<0.000000e+00> : vector<128x32xf32>
    %2 = tpu.matmul %0, %1, %cst {dimension_numbers = #tpu.dot_dimension_numbers<[1], [0], [0], [1], [0, 0, 1, 1], [], []>} : vector<128x32xf32>, vector<32x32xf32>, vector<128x32xf32> -> vector<128x32xf32>
    %c0_3 = arith.constant 0 : index
    %c0_4 = arith.constant 0 : index
    %3 = vector.load %arg3[%c0_3, %c0_4] : memref<1x32xf32, #tpu.memory_space<vmem>>, vector<1x32xf32>
    %4 = vector.broadcast %3 : vector<1x32xf32> to vector<128x32xf32>
    %5 = arith.addf %2, %4 : vector<128x32xf32>
    %cst_5 = arith.constant 0.000000e+00 : f32
    %6 = vector.broadcast %cst_5 : f32 to vector<128x32xf32>
    %7 = arith.maximumf %5, %6 : vector<128x32xf32>
    %c0_6 = arith.constant 0 : index
    %c0_7 = arith.constant 0 : index
    %8 = vector.load %arg4[%c0_6, %c0_7] : memref<1x32xf32, #tpu.memory_space<vmem>>, vector<1x32xf32>
    %9 = vector.broadcast %8 : vector<1x32xf32> to vector<128x32xf32>
    %10 = arith.mulf %7, %9 : vector<128x32xf32>
    %cst_8 = arith.constant dense<0.000000e+00> : vector<128xf32>
    %11 = vector.multi_reduction <add>, %10, %cst_8 [1] : vector<128x32xf32> to vector<128xf32>
    %c0_9 = arith.constant 0 : index
    %c0_10 = arith.constant 0 : index
    %12 = memref.load %arg5[%c0_9, %c0_10] : memref<1x1xf32, #tpu.memory_space<smem>>
    %13 = vector.broadcast %12 : f32 to vector<128xf32>
    %14 = arith.addf %11, %13 : vector<128xf32>
    %15 = vector.shape_cast %14 : vector<128xf32> to vector<1x128xf32>
    %c0_11 = arith.constant 0 : index
    %c0_12 = arith.constant 0 : index
    %16 = vector.load %arg6[%c0_11, %c0_12] : memref<1x128xf32, #tpu.memory_space<vmem>>, vector<1x128xf32>
    tpu.vector_store %arg6[%c0_11, %c0_12], %15 {strides = array<i32>} : memref<1x128xf32, #tpu.memory_space<vmem>>, vector<1x128xf32>,
    return
  }
  func.func @transform_0(%arg0: i32) -> (i32, i32) {
    %c0_i32 = arith.constant 0 : i32
    %c0_i32_0 = arith.constant 0 : i32
    return %arg0, %c0_i32 : i32, i32
  }
  func.func @transform_1(%arg0: i32) -> (i32, i32) {
    %c0_i32 = arith.constant 0 : i32
    %c0_i32_0 = arith.constant 0 : i32
    %c0_i32_1 = arith.constant 0 : i32
    return %c0_i32, %c0_i32_0 : i32, i32
  }
  func.func @transform_2(%arg0: i32) -> (i32, i32) {
    %c0_i32 = arith.constant 0 : i32
    %c0_i32_0 = arith.constant 0 : i32
    %c0_i32_1 = arith.constant 0 : i32
    return %c0_i32, %c0_i32_0 : i32, i32
  }
  func.func @transform_3(%arg0: i32) -> (i32, i32) {
    %c0_i32 = arith.constant 0 : i32
    %c0_i32_0 = arith.constant 0 : i32
    %c0_i32_1 = arith.constant 0 : i32
    return %c0_i32, %c0_i32_0 : i32, i32
  }
  func.func @transform_4(%arg0: i32) -> (i32, i32) {
    %c0_i32 = arith.constant 0 : i32
    %c0_i32_0 = arith.constant 0 : i32
    %c0_i32_1 = arith.constant 0 : i32
    return %c0_i32, %c0_i32_0 : i32, i32
  }
  func.func @transform_5(%arg0: i32) -> (i32, i32) {
    %c0_i32 = arith.constant 0 : i32
    %c0_i32_0 = arith.constant 0 : i32
    return %arg0, %c0_i32 : i32, i32
  }
}

</mosaic_0001>

<llo_original>
// kernel: tpu_custom_call.1
$region0: #{tpu_custom_call.1}
  #allocation0 [shape = 'u32[]', space=smem, size = 0x4, offset = 0x4, fixed_abs, tag = 'smem constant byte address 0x4 - core index']
  #allocation1 [shape = 'u32[72,128]{1,0:T(1,128)}', space=vmem, size = 0x9000, scoped, tag = 'internal scratch']
  #allocation2 [shape = 'f32[1,1]{1,0:T(1,128)S(6)}', space=smem, size = 0x200, scoped, tag = 'scoped memory for tpu_custom_call.1']
  %s0 = inlined_call_operand.vmem [shape: f32[128,32], index: 0, kind: input, shape index: {}]
  %s1 = inlined_call_operand.vmem [shape: f32[32,32], index: 1, kind: input, shape index: {}]
  %s2 = inlined_call_operand.vmem [shape: f32[1,32], index: 2, kind: input, shape index: {}]
  %s3 = inlined_call_operand.vmem [shape: f32[1,32], index: 3, kind: input, shape index: {}]
  %s4 = inlined_call_operand.<no memory space> [shape: f32[1,1], index: 4, kind: input, shape index: {}]
  %s5 = inlined_call_operand.hbm [shape: f32[1,128], index: 5, kind: output, shape index: {}]
  %s6 = sld [smem:[#allocation0]]
  $region30: #{tpu_custom_call.1} parent=0
    _
  %s8 = ssub.s32 1, %s6
  %s9 = scalar_select 0, %s8, %s6
  %10 = sst [smem:[#allocation2]] %s4
  $region1: #{tpu_custom_call.1} parent=0
    #allocation3 [shape = 'u8[512]{0}', space=vmem, size = 0x400, scoped, tag = 'output window, operand 0, single buffered']
    #allocation4 [shape = 's32[1]{0}', space=sflag, size = 0x4, scoped, tag = 'scoped memory for tpu_custom_call.1']
    %11 = vsyncpa [#allocation4], 0
    // Predicated region
    $region2: #{tpu_custom_call.1} parent=1 // pred_check
      _
    $region3: #{tpu_custom_call.1} parent=1 // pred_check_branch
      %13 = sbr.rel (0) target = $region5
    $region4: #{tpu_custom_call.1} parent=1 // pred_region
      _
    $region5: #{tpu_custom_call.1} parent=1 // pred_fallthru
      _
    // Predicated region
    $region6: #{tpu_custom_call.1} parent=1 // pred_check
      _
    $region7: #{tpu_custom_call.1} parent=1 // pred_check_branch
      %15 = sbr.rel (0) target = $region9
    $region8: #{tpu_custom_call.1} parent=1 // pred_region
      _
    $region9: #{tpu_custom_call.1} parent=1 // pred_fallthru
      _
    // Predicated region
    $region10: #{tpu_custom_call.1} parent=1 // pred_check
      _
    $region11: #{tpu_custom_call.1} parent=1 // pred_check_branch
      %17 = sbr.rel (0) target = $region13
    $region12: #{tpu_custom_call.1} parent=1 // pred_region
      _
    $region13: #{tpu_custom_call.1} parent=1 // pred_fallthru
      _
    // Predicated region
    $region14: #{tpu_custom_call.1} parent=1 // pred_check
      _
    $region15: #{tpu_custom_call.1} parent=1 // pred_check_branch
      %19 = sbr.rel (0) target = $region17
    $region16: #{tpu_custom_call.1} parent=1 // pred_region
      _
    $region17: #{tpu_custom_call.1} parent=1 // pred_fallthru
      _
    // Predicated region
    $region18: #{tpu_custom_call.1} parent=1 // pred_check
      _
    $region19: #{tpu_custom_call.1} parent=1 // pred_check_branch
      %21 = sbr.rel (0) target = $region21
    $region20: #{tpu_custom_call.1} parent=1 // pred_region
      _
    $region21: #{tpu_custom_call.1} parent=1 // pred_fallthru
      _
    %v22 = vld [vmem:[%s0] sm:$0xff]
    %v23 = vld [vmem:[%s0 + $0x8] sm:$0xff]
    %v24 = vld [vmem:[%s0 + $0x10] sm:$0xff]
    %v25 = vld [vmem:[%s0 + $0x18] sm:$0xff]
    %v26 = vld [vmem:[%s0 + $0x20] sm:$0xff]
    %v27 = vld [vmem:[%s0 + $0x28] sm:$0xff]
    %v28 = vld [vmem:[%s0 + $0x30] sm:$0xff]
    %v29 = vld [vmem:[%s0 + $0x38] sm:$0xff]
    %v30 = vld [vmem:[%s0 + $0x40] sm:$0xff]
    %v31 = vld [vmem:[%s0 + $0x48] sm:$0xff]
    %v32 = vld [vmem:[%s0 + $0x50] sm:$0xff]
    %v33 = vld [vmem:[%s0 + $0x58] sm:$0xff]
    %v34 = vld [vmem:[%s0 + $0x60] sm:$0xff]
    %v35 = vld [vmem:[%s0 + $0x68] sm:$0xff]
    %v36 = vld [vmem:[%s0 + $0x70] sm:$0xff]
    %v37 = vld [vmem:[%s0 + $0x78] sm:$0xff]
    %v38 = vld [vmem:[%s1] sm:$0xff]
    %v39 = vld [vmem:[%s1 + $0x8] sm:$0xff]
    %v40 = vld [vmem:[%s1 + $0x10] sm:$0xff]
    %v41 = vld [vmem:[%s1 + $0x18] sm:$0xff]
    %v42 = vld [vmem:[%s2] sm:$0x1]
    %v44 = vperm.slane %v42, 0
    %vm46 = vcmask 261120
    %v48 = vsel %vm46, %v22, 0
    %v51 = vsel %vm46, %v23, 0
    %v54 = vsel %vm46, %v24, 0
    %v57 = vsel %vm46, %v25, 0
    %v60 = vsel %vm46, %v26, 0
    %v63 = vsel %vm46, %v27, 0
    %v66 = vsel %vm46, %v28, 0
    %v69 = vsel %vm46, %v29, 0
    %v72 = vsel %vm46, %v30, 0
    %v75 = vsel %vm46, %v31, 0
    %v78 = vsel %vm46, %v32, 0
    %v81 = vsel %vm46, %v33, 0
    %v84 = vsel %vm46, %v34, 0
    %v87 = vsel %vm46, %v35, 0
    %v90 = vsel %vm46, %v36, 0
    %v93 = vsel %vm46, %v37, 0
    %95 = vmatpush.msra.mxu0 0.0
    %96 = vmatpush.msra.mxu0 0.0
    %97 = vmatpush.msra.mxu0 0.0
    %98 = vmatpush.msra.mxu0 0.0
    %99 = vmatpush.msra.mxu0 0.0
    %100 = vmatpush.msra.mxu0 0.0
    %101 = vmatpush.msra.mxu0 0.0
    %102 = vmatpush.msra.mxu0 0.0
    %103 = vmatpush.msra.mxu0 0.0
    %104 = vmatpush.msra.mxu0 0.0
    %105 = vmatpush.msra.mxu0 0.0
    %106 = vmatpush.msra.mxu0 0.0
    %107 = vmatpush.msra.mxu0 %v41
    %108 = vmatpush.msra.mxu0 %v40
    %109 = vmatpush.msra.mxu0 %v39
    %110 = vmatpush.msra.mxu0 %v38
    %111 = vmatmul.f32.gmra.mxu0 %v48
    %v112 = vpop.f32.mrf.mxu0
    %v113 = vadd.f32 %v44, %v112
    %114 = vmatmul.f32.gmra.mxu0 %v51
    %v115 = vpop.f32.mrf.mxu0
    %v116 = vadd.f32 %v44, %v115
    %117 = vmatmul.f32.gmra.mxu0 %v54
    %v118 = vpop.f32.mrf.mxu0
    %v119 = vadd.f32 %v44, %v118
    %120 = vmatmul.f32.gmra.mxu0 %v57
    %v121 = vpop.f32.mrf.mxu0
    %v122 = vadd.f32 %v44, %v121
    %123 = vmatmul.f32.gmra.mxu0 %v60
    %v124 = vpop.f32.mrf.mxu0
    %v125 = vadd.f32 %v44, %v124
    %126 = vmatmul.f32.gmra.mxu0 %v63
    %v127 = vpop.f32.mrf.mxu0
    %v128 = vadd.f32 %v44, %v127
    %129 = vmatmul.f32.gmra.mxu0 %v66
    %v130 = vpop.f32.mrf.mxu0
    %v131 = vadd.f32 %v44, %v130
    %132 = vmatmul.f32.gmra.mxu0 %v69
    %v133 = vpop.f32.mrf.mxu0
    %v134 = vadd.f32 %v44, %v133
    %135 = vmatmul.f32.gmra.mxu0 %v72
    %v136 = vpop.f32.mrf.mxu0
    %v137 = vadd.f32 %v44, %v136
    %138 = vmatmul.f32.gmra.mxu0 %v75
    %v139 = vpop.f32.mrf.mxu0
    %v140 = vadd.f32 %v44, %v139
    %141 = vmatmul.f32.gmra.mxu0 %v78
    %v142 = vpop.f32.mrf.mxu0
    %v143 = vadd.f32 %v44, %v142
    %144 = vmatmul.f32.gmra.mxu0 %v81
    %v145 = vpop.f32.mrf.mxu0
    %v146 = vadd.f32 %v44, %v145
    %147 = vmatmul.f32.gmra.mxu0 %v84
    %v148 = vpop.f32.mrf.mxu0
    %v149 = vadd.f32 %v44, %v148
    %150 = vmatmul.f32.gmra.mxu0 %v87
    %v151 = vpop.f32.mrf.mxu0
    %v152 = vadd.f32 %v44, %v151
    %153 = vmatmul.f32.gmra.mxu0 %v90
    %v154 = vpop.f32.mrf.mxu0
    %v155 = vadd.f32 %v44, %v154
    %156 = vmatmul.f32.gmra.mxu0 %v93
    %v157 = vpop.f32.mrf.mxu0
    %v158 = vadd.f32 %v44, %v157
    %159 = vdwg.mxu0
    %v160 = vmax.f32 %v113, 0.0
    %v161 = vmax.f32 %v116, 0.0
    %v162 = vmax.f32 %v119, 0.0
    %v163 = vmax.f32 %v122, 0.0
    %v164 = vmax.f32 %v125, 0.0
    %v165 = vmax.f32 %v128, 0.0
    %v166 = vmax.f32 %v131, 0.0
    %v167 = vmax.f32 %v134, 0.0
    %v168 = vmax.f32 %v137, 0.0
    %v169 = vmax.f32 %v140, 0.0
    %v170 = vmax.f32 %v143, 0.0
    %v171 = vmax.f32 %v146, 0.0
    %v172 = vmax.f32 %v149, 0.0
    %v173 = vmax.f32 %v152, 0.0
    %v174 = vmax.f32 %v155, 0.0
    %v175 = vmax.f32 %v158, 0.0
    %v176 = vld [vmem:[%s3] sm:$0x1]
    %v178 = vperm.slane %v176, 0
    %v180 = vmul.f32 %v160, %v178
    %v181 = vmul.f32 %v161, %v178
    %v182 = vmul.f32 %v162, %v178
    %v183 = vmul.f32 %v163, %v178
    %v184 = vmul.f32 %v164, %v178
    %v185 = vmul.f32 %v165, %v178
    %v186 = vmul.f32 %v166, %v178
    %v187 = vmul.f32 %v167, %v178
    %v188 = vmul.f32 %v168, %v178
    %v189 = vmul.f32 %v169, %v178
    %v190 = vmul.f32 %v170, %v178
    %v191 = vmul.f32 %v171, %v178
    %v192 = vmul.f32 %v172, %v178
    %v193 = vmul.f32 %v173, %v178
    %v194 = vmul.f32 %v174, %v178
    %v195 = vmul.f32 %v175, %v178
    %v196 = vsel %vm46, %v180, 0.0
    %197 = vadd.xlane.f32.xlu0 %v196
    %v198 = vpop.xlane.xlu0 %197
    %v199 = vsel %vm46, %v181, 0.0
    %200 = vadd.xlane.f32.xlu0 %v199
    %v201 = vpop.xlane.xlu0 %200
    %v202 = vsel %vm46, %v182, 0.0
    %203 = vadd.xlane.f32.xlu0 %v202
    %v204 = vpop.xlane.xlu0 %203
    %v205 = vsel %vm46, %v183, 0.0
    %206 = vadd.xlane.f32.xlu0 %v205
    %v207 = vpop.xlane.xlu0 %206
    %v208 = vsel %vm46, %v184, 0.0
    %209 = vadd.xlane.f32.xlu0 %v208
    %v210 = vpop.xlane.xlu0 %209
    %v211 = vsel %vm46, %v185, 0.0
    %212 = vadd.xlane.f32.xlu0 %v211
    %v213 = vpop.xlane.xlu0 %212
    %v214 = vsel %vm46, %v186, 0.0
    %215 = vadd.xlane.f32.xlu0 %v214
    %v216 = vpop.xlane.xlu0 %215
    %v217 = vsel %vm46, %v187, 0.0
    %218 = vadd.xlane.f32.xlu0 %v217
    %v219 = vpop.xlane.xlu0 %218
    %v220 = vsel %vm46, %v188, 0.0
    %221 = vadd.xlane.f32.xlu0 %v220
    %v222 = vpop.xlane.xlu0 %221
    %v223 = vsel %vm46, %v189, 0.0
    %224 = vadd.xlane.f32.xlu0 %v223
    %v225 = vpop.xlane.xlu0 %224
    %v226 = vsel %vm46, %v190, 0.0
    %227 = vadd.xlane.f32.xlu0 %v226
    %v228 = vpop.xlane.xlu0 %227
    %v229 = vsel %vm46, %v191, 0.0
    %230 = vadd.xlane.f32.xlu0 %v229
    %v231 = vpop.xlane.xlu0 %230
    %v232 = vsel %vm46, %v192, 0.0
    %233 = vadd.xlane.f32.xlu0 %v232
    %v234 = vpop.xlane.xlu0 %233
    %v235 = vsel %vm46, %v193, 0.0
    %236 = vadd.xlane.f32.xlu0 %v235
    %v237 = vpop.xlane.xlu0 %236
    %v238 = vsel %vm46, %v194, 0.0
    %239 = vadd.xlane.f32.xlu0 %v238
    %v240 = vpop.xlane.xlu0 %239
    %v241 = vsel %vm46, %v195, 0.0
    %242 = vadd.xlane.f32.xlu0 %v241
    %v243 = vpop.xlane.xlu0 %242
    %s244 = sld [smem:[#allocation2]]
    %v245 = vstv %s244
    %v246 = vadd.f32 %v198, %v245
    %v247 = vadd.f32 %v201, %v245
    %v248 = vadd.f32 %v204, %v245
    %v249 = vadd.f32 %v207, %v245
    %v250 = vadd.f32 %v210, %v245
    %v251 = vadd.f32 %v213, %v245
    %v252 = vadd.f32 %v216, %v245
    %v253 = vadd.f32 %v219, %v245
    %v254 = vadd.f32 %v222, %v245
    %v255 = vadd.f32 %v225, %v245
    %v256 = vadd.f32 %v228, %v245
    %v257 = vadd.f32 %v231, %v245
    %v258 = vadd.f32 %v234, %v245
    %v259 = vadd.f32 %v237, %v245
    %v260 = vadd.f32 %v240, %v245
    %v261 = vadd.f32 %v243, %v245
    %v278 = vlaneseq
    %v279 = vand.u32 %v278, 127
    %v280 = vperm.slane %v246, %v279
    %v281 = vadd.s32 %v279, 4294967288
    %v282 = vperm.slane %v247, %v281
    %vm283 = vcmask 130112
    %v284 = vsel %vm283, %v282, %v280
    %v285 = vadd.s32 %v279, 4294967280
    %v286 = vperm.slane %v248, %v285
    %vm287 = vcmask 195712
    %v288 = vsel %vm287, %v286, %v284
    %v289 = vadd.s32 %v279, 4294967272
    %v290 = vperm.slane %v249, %v289
    %vm291 = vcmask 261312
    %v292 = vsel %vm291, %v290, %v288
    %v293 = vadd.s32 %v279, 4294967264
    %v294 = vperm.slane %v250, %v293
    %vm295 = vcmask 326912
    %v296 = vsel %vm295, %v294, %v292
    %v297 = vadd.s32 %v279, 4294967256
    %v298 = vperm.slane %v251, %v297
    %vm299 = vcmask 392512
    %v300 = vsel %vm299, %v298, %v296
    %v301 = vadd.s32 %v279, 4294967248
    %v302 = vperm.slane %v252, %v301
    %vm303 = vcmask 458112
    %v304 = vsel %vm303, %v302, %v300
    %v305 = vadd.s32 %v279, 4294967240
    %v306 = vperm.slane %v253, %v305
    %vm307 = vcmask 523712
    %v308 = vsel %vm307, %v306, %v304
    %v309 = vadd.s32 %v279, 4294967232
    %v310 = vperm.slane %v254, %v309
    %vm311 = vcmask 589312
    %v312 = vsel %vm311, %v310, %v308
    %v313 = vadd.s32 %v279, 4294967224
    %v314 = vperm.slane %v255, %v313
    %vm315 = vcmask 654912
    %v316 = vsel %vm315, %v314, %v312
    %v317 = vadd.s32 %v279, 4294967216
    %v318 = vperm.slane %v256, %v317
    %vm319 = vcmask 720512
    %v320 = vsel %vm319, %v318, %v316
    %v321 = vadd.s32 %v279, 4294967208
    %v322 = vperm.slane %v257, %v321
    %vm323 = vcmask 786112
    %v324 = vsel %vm323, %v322, %v320
    %v325 = vadd.s32 %v279, 4294967200
    %v326 = vperm.slane %v258, %v325
    %vm327 = vcmask 851712
    %v328 = vsel %vm327, %v326, %v324
    %v329 = vadd.s32 %v279, 4294967192
    %v330 = vperm.slane %v259, %v329
    %vm331 = vcmask 917312
    %v332 = vsel %vm331, %v330, %v328
    %v333 = vadd.s32 %v279, 4294967184
    %v334 = vperm.slane %v260, %v333
    %vm335 = vcmask 982912
    %v336 = vsel %vm335, %v334, %v332
    %v337 = vadd.s32 %v279, 4294967176
    %v338 = vperm.slane %v261, %v337
    %vm339 = vcmask 1048512
    %v340 = vsel %vm339, %v338, %v336
    %342 = vst [vmem:[#allocation3] sm:$0x1] %v340
    // Predicated region
    $region22: #{tpu_custom_call.1} parent=1 // pred_check
      _
    $region23: #{tpu_custom_call.1} parent=1 // pred_check_branch
      %344 = sbr.rel (0) target = $region25
    $region24: #{tpu_custom_call.1} parent=1 // pred_region
      %346 = vsyncadd [#allocation4], 0
      %s348 = sshll.u32 [#allocation3], 4
      %s349 = int_to_ptr.vmem [resolvable:$true] %s348
      %s350 = sshll.u32 %s5, 4
      %s351 = int_to_ptr.hbm [resolvable:$true] %s350
      %353 = dma.vmem_to_hbm [thread:$0]  %s349, 16, %s351, [#allocation4]
    $region25: #{tpu_custom_call.1} parent=1 // pred_fallthru
      _
    // Predicated region
    $region26: #{tpu_custom_call.1} parent=1 // pred_check
      _
    $region27: #{tpu_custom_call.1} parent=1 // pred_check_branch
      %355 = sbr.rel (0) target = $region29
    $region28: #{tpu_custom_call.1} parent=1 // pred_region
      %357 = dma.done [#allocation4], 16
    $region29: #{tpu_custom_call.1} parent=1 // pred_fallthru
      _
    %358 = vsyncpa [#allocation4], 1

</llo_original>
